<compile_context>
chip_gen: v5e
topology: v5e:2x2
jax: 0.10.0
libtpu: 0.0.40
codegen_flags: <defaults>
</compile_context>

<pallas_src>
import jax
import jax.numpy as jnp
from jax.experimental import pallas as pl
from jax.experimental.pallas import tpu as pltpu


def _conv1x1_vpu_kernel(x_ref, w_ref, b_ref, o_ref):
    """Small-channel path: broadcast-FMA on the VPU, weights/bias in SMEM.

    x_ref: (C_in, T) VMEM     w_ref: (C_out, C_in) SMEM
    b_ref: (C_out,)  SMEM     o_ref: (C_out, T) VMEM
    """
    c_in = x_ref.shape[0]
    c_out = o_ref.shape[0]
    x = x_ref[...].astype(jnp.float32)
    for co in range(c_out):                       # static unroll (tiny C_out)
        acc = x[0:1, :] * w_ref[co, 0]
        for ci in range(1, c_in):
            acc = acc + x[ci:ci + 1, :] * w_ref[co, ci]
        o_ref[co:co + 1, :] = (acc + b_ref[co]).astype(o_ref.dtype)


def _conv1x1_mxu_kernel(x_ref, w_ref, b_ref, o_ref):
    """General path: MXU matmul with f32 accumulation.

    x_ref: (C_in, T) VMEM     w_ref: (C_out, C_in) VMEM
    b_ref: (C_out, 1) VMEM    o_ref: (C_out, T) VMEM
    """
    acc = jnp.dot(w_ref[...], x_ref[...], preferred_element_type=jnp.float32)
    o_ref[...] = (acc + b_ref[...]).astype(o_ref.dtype)


def _pick_tile_hw(hw, c_in, c_out, itemsize, budget_bytes):
    """Largest lane-dense HW tile that (a) fits the double-buffered VMEM budget
    and (b) divides HW so no pad copy is needed.  Returns (tile, needs_pad)."""
    per_col = 2 * (c_in + c_out) * itemsize       # in + out, double buffered
    max_cols = max(128, budget_bytes // max(per_col, 1))
    if hw <= max_cols:
        return hw, False                          # single full-row tile
    t = (max_cols // 128) * 128
    while t >= 128:
        if hw % t == 0:
            return t, False
        t -= 128
    return (max_cols // 128) * 128, True          # rare fallback: pad last tile


def out_conv(x_nchw, weight, bias, *, vmem_budget_bytes=24 << 20):
    """1x1 conv, equivalent to nn.Conv2d(in_c, out_c, kernel_size=1).

    x_nchw: (N, C_in, H, W)
    weight: (C_out, C_in)   (spatial (1,1) dims of the PyTorch kernel squeezed)
    bias:   (C_out,)
    returns (N, C_out, H, W)
    """
    N, C_in, H, W = x_nchw.shape
    C_out = weight.shape[0]
    HW = H * W
    dtype = x_nchw.dtype
    itemsize = jnp.dtype(dtype).itemsize

    x3 = x_nchw.reshape(N, C_in, HW)              # contiguous reshape: free

    tile_hw, needs_pad = _pick_tile_hw(HW, C_in, C_out, itemsize,
                                       vmem_budget_bytes)
    HW_p = HW
    if needs_pad:
        HW_p = ((HW + tile_hw - 1) // tile_hw) * tile_hw
        x3 = jnp.pad(x3, ((0, 0), (0, 0), (0, HW_p - HW)))
    n_tiles = HW_p // tile_hw

    cost = pl.CostEstimate(
        flops=2 * N * HW * C_in * C_out,
        transcendentals=0,
        bytes_accessed=N * HW * (C_in + C_out) * itemsize
        + (C_in * C_out + C_out) * 4,
    )
    cparams = pltpu.CompilerParams(
        # batch and HW tiles are independent -> both parallel (megacore/v7x
        # gets >=2 steps from the batch axis even when one tile covers HW).
        dimension_semantics=("parallel", "parallel"),
        vmem_limit_bytes=48 << 20,  # below v7x's 64 MiB physical, above defaults
    )

    # None in block_shape squeezes the batch dim: kernel sees (C, tile_hw).
    x_spec = pl.BlockSpec((None, C_in, tile_hw), lambda n, t: (n, 0, t))
    o_spec = pl.BlockSpec((None, C_out, tile_hw), lambda n, t: (n, 0, t))

    small_channels = (C_in * C_out) <= 1024 and C_in <= 64 and C_out <= 64
    if small_channels:
        # Tiny contraction: skip the (mostly idle) MXU; weights/bias are SMEM
        # scalars, kernel does C_out*C_in broadcast-FMAs on the lane-dense slab.
        kernel = _conv1x1_vpu_kernel
        w_arg = weight.astype(jnp.float32)                 # (C_out, C_in)
        b_arg = bias.astype(jnp.float32)                   # (C_out,)
        w_spec = pl.BlockSpec(memory_space=pltpu.MemorySpace.SMEM)
        b_spec = pl.BlockSpec(memory_space=pltpu.MemorySpace.SMEM)
    else:
        kernel = _conv1x1_mxu_kernel
        w_arg = weight.astype(dtype)                       # (C_out, C_in)
        b_arg = bias.reshape(C_out, 1).astype(jnp.float32)
        w_spec = pl.BlockSpec((C_out, C_in), lambda n, t: (0, 0))
        b_spec = pl.BlockSpec((C_out, 1), lambda n, t: (0, 0))

    y3 = pl.pallas_call(
        kernel,
        out_shape=jax.ShapeDtypeStruct((N, C_out, HW_p), dtype),
        grid_spec=pltpu.PrefetchScalarGridSpec(
            num_scalar_prefetch=0,
            grid=(N, n_tiles),
            in_specs=[x_spec, w_spec, b_spec],
            out_specs=o_spec,
        ),
        compiler_params=cparams,
        cost_estimate=cost,
    )(x3, w_arg, b_arg)

    if needs_pad:
        y3 = y3[:, :, :HW]
    return y3.reshape(N, C_out, H, W)


if __name__ == "__main__":
    # Small deterministic example: batch=2, in_channels=4, out_channels=3, 16x16.
    N, C_in, C_out, H, W = 2, 4, 3, 16, 16

    key = jax.random.PRNGKey(0)
    kx, kw, kb = jax.random.split(key, 3)

    x = jax.random.normal(kx, (N, C_in, H, W), dtype=jnp.float32)
    # Conv2d(kernel_size=1) parameters: weight (C_out, C_in, 1, 1) squeezed, bias (C_out,)
    bound = 1.0 / (C_in ** 0.5)
    weight = jax.random.uniform(kw, (C_out, C_in), minval=-bound, maxval=bound,
                                dtype=jnp.float32)
    bias = jax.random.uniform(kb, (C_out,), minval=-bound, maxval=bound,
                              dtype=jnp.float32)

    y = out_conv(x, weight, bias)
    y = jax.block_until_ready(y)

    # Reference check against plain-JAX einsum (same math as the PyTorch 1x1 conv).
    y_ref = jnp.einsum("nchw,oc->nohw", x, weight) + bias[None, :, None, None]
    assert y.shape == (N, C_out, H, W)
    assert jnp.allclose(y, y_ref, atol=1e-5, rtol=1e-5)

    print("KERNEL_OK")
</pallas_src>

<mosaic_0001>
module attributes {stable_mosaic.version = 11 : i64} {
  func.func @_conv1x1_vpu_kernel(%arg0: i32, %arg1: i32, %arg2: memref<1x4x256xf32, #tpu.memory_space<vmem>>, %arg3: memref<3x4xf32, #tpu.memory_space<smem>>, %arg4: memref<3xf32, #tpu.memory_space<smem>>, %arg5: memref<1x3x256xf32, #tpu.memory_space<vmem>>) attributes {dimension_semantics = [#tpu.dimension_semantics<parallel>, #tpu.dimension_semantics<parallel>], iteration_bounds = array<i64: 2, 1>, scalar_prefetch = 0 : i64, scratch_operands = 0 : i64, tpu.core_type = #tpu.core_type<tc>, window_params = [{transform_indices = @transform_0, window_bounds = array<i64: 1, 4, 256>}, {transform_indices = @transform_1, window_bounds = array<i64: 3, 4>}, {transform_indices = @transform_2, window_bounds = array<i64: 3>}, {transform_indices = @transform_3, window_bounds = array<i64: 1, 3, 256>}]} {
    %c0 = arith.constant 0 : index
    %c0_0 = arith.constant 0 : index
    %c0_1 = arith.constant 0 : index
    %0 = vector.load %arg2[%c0, %c0_0, %c0_1] : memref<1x4x256xf32, #tpu.memory_space<vmem>>, vector<1x4x256xf32>
    %1 = vector.shape_cast %0 : vector<1x4x256xf32> to vector<4x256xf32>
    %2 = vector.extract_strided_slice %1 {offsets = [0, 0], sizes = [1, 256], strides = [1, 1]} : vector<4x256xf32> to vector<1x256xf32>
    %c0_2 = arith.constant 0 : index
    %c0_3 = arith.constant 0 : index
    %3 = memref.load %arg3[%c0_2, %c0_3] : memref<3x4xf32, #tpu.memory_space<smem>>
    %4 = vector.broadcast %3 : f32 to vector<1x256xf32>
    %5 = arith.mulf %2, %4 : vector<1x256xf32>
    %6 = vector.extract_strided_slice %1 {offsets = [1, 0], sizes = [1, 256], strides = [1, 1]} : vector<4x256xf32> to vector<1x256xf32>
    %c0_4 = arith.constant 0 : index
    %c1 = arith.constant 1 : index
    %7 = memref.load %arg3[%c0_4, %c1] : memref<3x4xf32, #tpu.memory_space<smem>>
    %8 = vector.broadcast %7 : f32 to vector<1x256xf32>
    %9 = arith.mulf %6, %8 : vector<1x256xf32>
    %10 = arith.addf %5, %9 : vector<1x256xf32>
    %11 = vector.extract_strided_slice %1 {offsets = [2, 0], sizes = [1, 256], strides = [1, 1]} : vector<4x256xf32> to vector<1x256xf32>
    %c0_5 = arith.constant 0 : index
    %c2 = arith.constant 2 : index
    %12 = memref.load %arg3[%c0_5, %c2] : memref<3x4xf32, #tpu.memory_space<smem>>
    %13 = vector.broadcast %12 : f32 to vector<1x256xf32>
    %14 = arith.mulf %11, %13 : vector<1x256xf32>
    %15 = arith.addf %10, %14 : vector<1x256xf32>
    %16 = vector.extract_strided_slice %1 {offsets = [3, 0], sizes = [1, 256], strides = [1, 1]} : vector<4x256xf32> to vector<1x256xf32>
    %c0_6 = arith.constant 0 : index
    %c3 = arith.constant 3 : index
    %17 = memref.load %arg3[%c0_6, %c3] : memref<3x4xf32, #tpu.memory_space<smem>>
    %18 = vector.broadcast %17 : f32 to vector<1x256xf32>
    %19 = arith.mulf %16, %18 : vector<1x256xf32>
    %20 = arith.addf %15, %19 : vector<1x256xf32>
    %c0_7 = arith.constant 0 : index
    %21 = memref.load %arg4[%c0_7] : memref<3xf32, #tpu.memory_space<smem>>
    %22 = vector.broadcast %21 : f32 to vector<1x256xf32>
    %23 = arith.addf %20, %22 : vector<1x256xf32>
    %c0_8 = arith.constant 0 : index
    %c0_9 = arith.constant 0 : index
    %c0_10 = arith.constant 0 : index
    %24 = vector.load %arg5[%c0_8, %c0_9, %c0_10] : memref<1x3x256xf32, #tpu.memory_space<vmem>>, vector<1x1x256xf32>
    %25 = vector.shape_cast %24 : vector<1x1x256xf32> to vector<1x256xf32>
    %26 = vector.shape_cast %23 : vector<1x256xf32> to vector<1x1x256xf32>
    tpu.vector_store %arg5[%c0_8, %c0_9, %c0_10], %26 {strides = array<i32>} : memref<1x3x256xf32, #tpu.memory_space<vmem>>, vector<1x1x256xf32>,
    %27 = vector.extract_strided_slice %1 {offsets = [0, 0], sizes = [1, 256], strides = [1, 1]} : vector<4x256xf32> to vector<1x256xf32>
    %c1_11 = arith.constant 1 : index
    %c0_12 = arith.constant 0 : index
    %28 = memref.load %arg3[%c1_11, %c0_12] : memref<3x4xf32, #tpu.memory_space<smem>>
    %29 = vector.broadcast %28 : f32 to vector<1x256xf32>
    %30 = arith.mulf %27, %29 : vector<1x256xf32>
    %31 = vector.extract_strided_slice %1 {offsets = [1, 0], sizes = [1, 256], strides = [1, 1]} : vector<4x256xf32> to vector<1x256xf32>
    %c1_13 = arith.constant 1 : index
    %c1_14 = arith.constant 1 : index
    %32 = memref.load %arg3[%c1_13, %c1_14] : memref<3x4xf32, #tpu.memory_space<smem>>
    %33 = vector.broadcast %32 : f32 to vector<1x256xf32>
    %34 = arith.mulf %31, %33 : vector<1x256xf32>
    %35 = arith.addf %30, %34 : vector<1x256xf32>
    %36 = vector.extract_strided_slice %1 {offsets = [2, 0], sizes = [1, 256], strides = [1, 1]} : vector<4x256xf32> to vector<1x256xf32>
    %c1_15 = arith.constant 1 : index
    %c2_16 = arith.constant 2 : index
    %37 = memref.load %arg3[%c1_15, %c2_16] : memref<3x4xf32, #tpu.memory_space<smem>>
    %38 = vector.broadcast %37 : f32 to vector<1x256xf32>
    %39 = arith.mulf %36, %38 : vector<1x256xf32>
    %40 = arith.addf %35, %39 : vector<1x256xf32>
    %41 = vector.extract_strided_slice %1 {offsets = [3, 0], sizes = [1, 256], strides = [1, 1]} : vector<4x256xf32> to vector<1x256xf32>
    %c1_17 = arith.constant 1 : index
    %c3_18 = arith.constant 3 : index
    %42 = memref.load %arg3[%c1_17, %c3_18] : memref<3x4xf32, #tpu.memory_space<smem>>
    %43 = vector.broadcast %42 : f32 to vector<1x256xf32>
    %44 = arith.mulf %41, %43 : vector<1x256xf32>
    %45 = arith.addf %40, %44 : vector<1x256xf32>
    %c1_19 = arith.constant 1 : index
    %46 = memref.load %arg4[%c1_19] : memref<3xf32, #tpu.memory_space<smem>>
    %47 = vector.broadcast %46 : f32 to vector<1x256xf32>
    %48 = arith.addf %45, %47 : vector<1x256xf32>
    %c0_20 = arith.constant 0 : index
    %c1_21 = arith.constant 1 : index
    %c0_22 = arith.constant 0 : index
    %49 = vector.load %arg5[%c0_20, %c1_21, %c0_22] : memref<1x3x256xf32, #tpu.memory_space<vmem>>, vector<1x1x256xf32>
    %50 = vector.shape_cast %49 : vector<1x1x256xf32> to vector<1x256xf32>
    %51 = vector.shape_cast %48 : vector<1x256xf32> to vector<1x1x256xf32>
    tpu.vector_store %arg5[%c0_20, %c1_21, %c0_22], %51 {strides = array<i32>} : memref<1x3x256xf32, #tpu.memory_space<vmem>>, vector<1x1x256xf32>,
    %52 = vector.extract_strided_slice %1 {offsets = [0, 0], sizes = [1, 256], strides = [1, 1]} : vector<4x256xf32> to vector<1x256xf32>
    %c2_23 = arith.constant 2 : index
    %c0_24 = arith.constant 0 : index
    %53 = memref.load %arg3[%c2_23, %c0_24] : memref<3x4xf32, #tpu.memory_space<smem>>
    %54 = vector.broadcast %53 : f32 to vector<1x256xf32>
    %55 = arith.mulf %52, %54 : vector<1x256xf32>
    %56 = vector.extract_strided_slice %1 {offsets = [1, 0], sizes = [1, 256], strides = [1, 1]} : vector<4x256xf32> to vector<1x256xf32>
    %c2_25 = arith.constant 2 : index
    %c1_26 = arith.constant 1 : index
    %57 = memref.load %arg3[%c2_25, %c1_26] : memref<3x4xf32, #tpu.memory_space<smem>>
    %58 = vector.broadcast %57 : f32 to vector<1x256xf32>
    %59 = arith.mulf %56, %58 : vector<1x256xf32>
    %60 = arith.addf %55, %59 : vector<1x256xf32>
    %61 = vector.extract_strided_slice %1 {offsets = [2, 0], sizes = [1, 256], strides = [1, 1]} : vector<4x256xf32> to vector<1x256xf32>
    %c2_27 = arith.constant 2 : index
    %c2_28 = arith.constant 2 : index
    %62 = memref.load %arg3[%c2_27, %c2_28] : memref<3x4xf32, #tpu.memory_space<smem>>
    %63 = vector.broadcast %62 : f32 to vector<1x256xf32>
    %64 = arith.mulf %61, %63 : vector<1x256xf32>
    %65 = arith.addf %60, %64 : vector<1x256xf32>
    %66 = vector.extract_strided_slice %1 {offsets = [3, 0], sizes = [1, 256], strides = [1, 1]} : vector<4x256xf32> to vector<1x256xf32>
    %c2_29 = arith.constant 2 : index
    %c3_30 = arith.constant 3 : index
    %67 = memref.load %arg3[%c2_29, %c3_30] : memref<3x4xf32, #tpu.memory_space<smem>>
    %68 = vector.broadcast %67 : f32 to vector<1x256xf32>
    %69 = arith.mulf %66, %68 : vector<1x256xf32>
    %70 = arith.addf %65, %69 : vector<1x256xf32>
    %c2_31 = arith.constant 2 : index
    %71 = memref.load %arg4[%c2_31] : memref<3xf32, #tpu.memory_space<smem>>
    %72 = vector.broadcast %71 : f32 to vector<1x256xf32>
    %73 = arith.addf %70, %72 : vector<1x256xf32>
    %c0_32 = arith.constant 0 : index
    %c2_33 = arith.constant 2 : index
    %c0_34 = arith.constant 0 : index
    %74 = vector.load %arg5[%c0_32, %c2_33, %c0_34] : memref<1x3x256xf32, #tpu.memory_space<vmem>>, vector<1x1x256xf32>
    %75 = vector.shape_cast %74 : vector<1x1x256xf32> to vector<1x256xf32>
    %76 = vector.shape_cast %73 : vector<1x256xf32> to vector<1x1x256xf32>
    tpu.vector_store %arg5[%c0_32, %c2_33, %c0_34], %76 {strides = array<i32>} : memref<1x3x256xf32, #tpu.memory_space<vmem>>, vector<1x1x256xf32>,
    return
  }
  func.func @transform_0(%arg0: i32, %arg1: i32) -> (i32, i32, i32) {
    %c0_i32 = arith.constant 0 : i32
    %c0_i32_0 = arith.constant 0 : i32
    return %arg0, %c0_i32, %arg1 : i32, i32, i32
  }
  func.func @transform_1(%arg0: i32, %arg1: i32) -> (i32, i32) {
    %c0_i32 = arith.constant 0 : i32
    %c0_i32_0 = arith.constant 0 : i32
    %c0_i32_1 = arith.constant 0 : i32
    return %c0_i32, %c0_i32_0 : i32, i32
  }
  func.func @transform_2(%arg0: i32, %arg1: i32) -> i32 {
    %c0_i32 = arith.constant 0 : i32
    %c0_i32_0 = arith.constant 0 : i32
    return %c0_i32 : i32
  }
  func.func @transform_3(%arg0: i32, %arg1: i32) -> (i32, i32, i32) {
    %c0_i32 = arith.constant 0 : i32
    %c0_i32_0 = arith.constant 0 : i32
    return %arg0, %c0_i32, %arg1 : i32, i32, i32
  }
}

</mosaic_0001>

<llo_original>
// kernel: tpu_custom_call.1
$region0: #{tpu_custom_call.1}
  #allocation0 [shape = 'u32[]', space=smem, size = 0x4, offset = 0x4, fixed_abs, tag = 'smem constant byte address 0x4 - core index']
  #allocation1 [shape = 'u32[72,128]{1,0:T(1,128)}', space=vmem, size = 0x9000, scoped, tag = 'internal scratch']
  %s0 = inlined_call_operand.hbm [shape: f32[2,4,256], index: 0, kind: input, shape index: {}]
  %s1 = inlined_call_operand.hbm [shape: f32[3,4], index: 1, kind: input, shape index: {}]
  %s2 = inlined_call_operand.vmem [shape: f32[3], index: 2, kind: input, shape index: {}]
  %s3 = inlined_call_operand.vmem [shape: f32[2,3,256], index: 3, kind: output, shape index: {}]
  %s4 = sld [smem:[#allocation0]]
  $region57: #{tpu_custom_call.1} parent=0
    _
  %s6 = ssub.s32 1, %s4
  %s7 = scalar_select 0, %s6, %s4
  $region1: #{tpu_custom_call.1} parent=0
    #allocation2 [shape = 'u8[8192]{0}', space=vmem, size = 0x2000, scoped, tag = 'input window, operand 0']
    #allocation3 [shape = 's32[2]{0}', space=sflag, size = 0x8, scoped, tag = 'scoped memory for tpu_custom_call.1']
    #allocation4 [shape = 's32[2]{0}', space=sflag, size = 0x8, scoped, tag = 'scoped memory for tpu_custom_call.1']
    #allocation5 [shape = 's32[2]{0}', space=sflag, size = 0x8, scoped, tag = 'scoped memory for tpu_custom_call.1']
    #allocation6 [shape = 'u8[2048]{0}', space=smem, size = 0x800, scoped, tag = 'input window, operand 1, single buffered']
    #allocation7 [shape = 'u8[512]{0}', space=smem, size = 0x200, scoped, tag = 'input window, operand 2, single buffered']
    %8 = vsyncpa [#allocation3], 0
    %s9 = scalar_lea.sflag [#allocation3], 1
    %10 = vsyncpa %s9, 0
    %11 = vsyncpa [#allocation4], 0
    %12 = vsyncpa [#allocation5], 0
    loop: start=0, step=1, limit=4
    $region2: #{tpu_custom_call.1} parent=1 // loop_pre_header
      _
    $region3: #{tpu_custom_call.1} parent=1 // loop_header
      %s14 = sphi 0, %s18
      %p15 = scmp.ge.s32.totalorder %s14, 4
      %s21 = sphi 0, %s33
      %s22 = sphi 0, %s29
      %s23 = sphi 0, %s21
      %s24 = sphi 0, %s22
      %s25 = sphi 0, %s23
      %s26 = sphi 0, %s24
      %s38 = sphi 0, %s40
      %s41 = sphi 0, %s38
      %s42 = sphi 0, %s41
      %s58 = sphi 0, %s42
      %s62 = sphi 0, %s62
      %s64 = sphi 0, %s62
      %s65 = sphi 0, %s64
      %s79 = sphi 0, %s65
      %s83 = sphi 0, %s83
      %s85 = sphi 0, %s83
      %s86 = sphi 0, %s85
      %s100 = sphi 0, %s86
      %s108 = sphi 0, %s110
      %s111 = sphi 0, %s108
      %s112 = sphi 0, %s111
      %s128 = sphi 0, %s112
    $region4: #{tpu_custom_call.1} parent=1 // loop_header_branch
      %17 = sbr.rel (%p15) target = $region8
    $region5: #{tpu_custom_call.1} parent=1 // loop_body
      %s19 = ssub.s32 %s14, 1
      %s20 = ssub.s32 %s14, 2
      %s27 = sadd.s32 1, %s22
      %p28 = scmp.ge.s32.totalorder %s27, 1
      %s29 = scalar_select %p28, 0, %s27
      %s30 = sadd.s32 1, %s21
      %s31 = scalar_select %p28, %s30, %s21
      %p32 = scmp.ge.s32.totalorder %s31, 2
      %s33 = scalar_select %p32, 0, %s31
      %s34 = ssub.s32 %s21, %s33
      %s35 = ssub.s32 %s22, %s29
      %s36 = sor.u32 %s34, %s35
      %p37 = scmp.eq.s32.totalorder %s36, 0
      %s39 = sadd.s32 %s38, 1
      %s40 = scalar_select %p37, %s38, %s39
      %p43 = pneg %p37
      %p44 = scmp.eq.s32.totalorder %s14, 1
      %p45 = por %p43, %p44
      %p46 = scmp.ne.s32.totalorder %s38, %s41
      %p47 = scmp.eq.s32.totalorder %s14, 0
      %p48 = por %p46, %p47
      %p49 = scmp.ne.s32.totalorder %s38, %s41
      %p50 = scmp.eq.s32.totalorder %s19, 1
      %p51 = por %p49, %p50
      %p52 = scmp.ne.s32.totalorder %s41, %s42
      %p53 = scmp.eq.s32.totalorder %s19, 0
      %p54 = por %p52, %p53
      %p55 = scmp.ne.s32.totalorder %s41, %s42
      %p56 = scmp.eq.s32.totalorder %s20, 1
      %p57 = por %p55, %p56
      %p59 = scmp.ne.s32.totalorder %s42, %s58
      %p60 = scmp.eq.s32.totalorder %s20, 0
      %p61 = por %p59, %p60
      %s63 = sadd.s32 %s62, 1
      %p66 = scmp.eq.s32.totalorder %s14, 1
      %p67 = scmp.ne.s32.totalorder %s62, %s64
      %p68 = scmp.eq.s32.totalorder %s14, 0
      %p69 = por %p67, %p68
      %p70 = scmp.ne.s32.totalorder %s62, %s64
      %p71 = scmp.eq.s32.totalorder %s19, 1
      %p72 = por %p70, %p71
      %p73 = scmp.ne.s32.totalorder %s64, %s65
      %p74 = scmp.eq.s32.totalorder %s19, 0
      %p75 = por %p73, %p74
      %p76 = scmp.ne.s32.totalorder %s64, %s65
      %p77 = scmp.eq.s32.totalorder %s20, 1
      %p78 = por %p76, %p77
      %p80 = scmp.ne.s32.totalorder %s65, %s79
      %p81 = scmp.eq.s32.totalorder %s20, 0
      %p82 = por %p80, %p81
      %s84 = sadd.s32 %s83, 1
      %p87 = scmp.eq.s32.totalorder %s14, 1
      %p88 = scmp.ne.s32.totalorder %s83, %s85
      %p89 = scmp.eq.s32.totalorder %s14, 0
      %p90 = por %p88, %p89
      %p91 = scmp.ne.s32.totalorder %s83, %s85
      %p92 = scmp.eq.s32.totalorder %s19, 1
      %p93 = por %p91, %p92
      %p94 = scmp.ne.s32.totalorder %s85, %s86
      %p95 = scmp.eq.s32.totalorder %s19, 0
      %p96 = por %p94, %p95
      %p97 = scmp.ne.s32.totalorder %s85, %s86
      %p98 = scmp.eq.s32.totalorder %s20, 1
      %p99 = por %p97, %p98
      %p101 = scmp.ne.s32.totalorder %s86, %s100
      %p102 = scmp.eq.s32.totalorder %s20, 0
      %p103 = por %p101, %p102
      %s104 = ssub.s32 %s21, %s33
      %s105 = ssub.s32 %s22, %s29
      %s106 = sor.u32 %s104, %s105
      %p107 = scmp.eq.s32.totalorder %s106, 0
      %s109 = sadd.s32 %s108, 1
      %s110 = scalar_select %p107, %s108, %s109
      %p113 = pneg %p107
      %p114 = scmp.eq.s32.totalorder %s14, 1
      %p115 = por %p113, %p114
      %p116 = scmp.ne.s32.totalorder %s108, %s111
      %p117 = scmp.eq.s32.totalorder %s14, 0
      %p118 = por %p116, %p117
      %p119 = scmp.ne.s32.totalorder %s108, %s111
      %p120 = scmp.eq.s32.totalorder %s19, 1
      %p121 = por %p119, %p120
      %p122 = scmp.ne.s32.totalorder %s111, %s112
      %p123 = scmp.eq.s32.totalorder %s19, 0
      %p124 = por %p122, %p123
      %p125 = scmp.ne.s32.totalorder %s111, %s112
      %p126 = scmp.eq.s32.totalorder %s20, 1
      %p127 = por %p125, %p126
      %p129 = scmp.ne.s32.totalorder %s112, %s128
      %p130 = scmp.eq.s32.totalorder %s20, 0
      %p131 = por %p129, %p130
      %p132 = scmp.le.s32.totalorder 1, %s14
      %p133 = scmp.lt.s32.totalorder %s14, 3
      %p134 = pnand %p132, %p133
      %p135 = pneg %p134
      // Predicated region
      $region9: #{tpu_custom_call.1} parent=5 // pred_check
        _
      $region10: #{tpu_custom_call.1} parent=5 // pred_check_branch
        %137 = sbr.rel (%p134) target = $region12
      $region11: #{tpu_custom_call.1} parent=5 // pred_region
        %s138 = ssub.s32 %s14, 1
        // Predicated region
        $region13: #{tpu_custom_call.1} parent=11 // pred_check
          %p139 = pneg %p75
        $region14: #{tpu_custom_call.1} parent=11 // pred_check_branch
          %141 = sbr.rel (%p139) target = $region16
        $region15: #{tpu_custom_call.1} parent=11 // pred_region
          %143 = vsyncadd [#allocation4], 0
          %s145 = sshll.u32 %s1, 4
          %s146 = int_to_ptr.hbm [resolvable:$true] %s145
          %148 = dma.hbm_to_smem %s146, 64, [#allocation6], [#allocation4]
        $region16: #{tpu_custom_call.1} parent=11 // pred_fallthru
          _
        // Predicated region
        $region17: #{tpu_custom_call.1} parent=11 // pred_check
          %p149 = pneg %p96
        $region18: #{tpu_custom_call.1} parent=11 // pred_check_branch
          %151 = sbr.rel (%p149) target = $region20
        $region19: #{tpu_custom_call.1} parent=11 // pred_region
          %153 = vsyncadd [#allocation5], 0
          %s155 = sshll.u32 %s2, 4
          %s156 = int_to_ptr.vmem [resolvable:$true] %s155
          %158 = dma.vmem_to_smem %s156, 16, [#allocation7], [#allocation5]
        $region20: #{tpu_custom_call.1} parent=11 // pred_fallthru
          _
      $region12: #{tpu_custom_call.1} parent=5 // pred_fallthru
        _
      %p159 = scmp.lt.s32.totalorder %s14, 2
      // Predicated region
      $region21: #{tpu_custom_call.1} parent=5 // pred_check
        %p160 = pneg %p159
      $region22: #{tpu_custom_call.1} parent=5 // pred_check_branch
        %162 = sbr.rel (%p160) target = $region24
      $region23: #{tpu_custom_call.1} parent=5 // pred_region
        // Predicated region
        $region25: #{tpu_custom_call.1} parent=23 // pred_check
          %p163 = pneg %p48
        $region26: #{tpu_custom_call.1} parent=23 // pred_check_branch
          %165 = sbr.rel (%p163) target = $region28
        $region27: #{tpu_custom_call.1} parent=23 // pred_region
          %s166 = sand.u32 %s38, 1
          %s167 = scalar_lea.sflag [#allocation3], %s166
          %s168 = sand.u32 %s38, 1
          %s169 = smul.addr %s168, 8
          %s170 = scalar_lea.vmem [#allocation2], %s169
          %s171 = smul.u32 2, %s22
          %173 = vsyncadd %s167, 0
          %s174 = smul.addr %s21, 2
          %s175 = sadd.s32 %s171, %s174
          %s176 = smul.addr %s175, 4
          %s177 = scalar_lea.hbm %s0, %s176
          %s179 = sshll.u32 %s177, 4
          %s180 = int_to_ptr.hbm [resolvable:$true] %s179
          %s181 = sshll.u32 %s170, 4
          %s182 = int_to_ptr.vmem [resolvable:$true] %s181
          %184 = dma.hbm_to_vmem [thread:$0]  %s180, 128, %s182, %s167
        $region28: #{tpu_custom_call.1} parent=23 // pred_fallthru
          _
      $region24: #{tpu_custom_call.1} parent=5 // pred_fallthru
        _
      %p185 = scmp.le.s32.totalorder 1, %s14
      %p186 = scmp.lt.s32.totalorder %s14, 3
      %p187 = pnand %p185, %p186
      %p188 = pneg %p187
      // Predicated region
      $region29: #{tpu_custom_call.1} parent=5 // pred_check
        _
      $region30: #{tpu_custom_call.1} parent=5 // pred_check_branch
        %190 = sbr.rel (%p187) target = $region32
      $region31: #{tpu_custom_call.1} parent=5 // pred_region
        %s191 = ssub.s32 %s14, 1
        %s192 = sand.u32 %s41, 1
        %s193 = scalar_lea.sflag [#allocation3], %s192
        %s194 = sand.u32 %s41, 1
        %s195 = smul.addr %s194, 8
        %s196 = scalar_lea.vmem [#allocation2], %s195
        // Predicated region
        $region33: #{tpu_custom_call.1} parent=31 // pred_check
          %p197 = pneg %p54
        $region34: #{tpu_custom_call.1} parent=31 // pred_check_branch
          %199 = sbr.rel (%p197) target = $region36
        $region35: #{tpu_custom_call.1} parent=31 // pred_region
          %201 = dma.done %s193, 128
        $region36: #{tpu_custom_call.1} parent=31 // pred_fallthru
          _
        // Predicated region
        $region37: #{tpu_custom_call.1} parent=31 // pred_check
          %p202 = pneg %p75
        $region38: #{tpu_custom_call.1} parent=31 // pred_check_branch
          %204 = sbr.rel (%p202) target = $region40
        $region39: #{tpu_custom_call.1} parent=31 // pred_region
          %206 = dma.done [#allocation4], 64
        $region40: #{tpu_custom_call.1} parent=31 // pred_fallthru
          _
        // Predicated region
        $region41: #{tpu_custom_call.1} parent=31 // pred_check
          %p207 = pneg %p96
        $region42: #{tpu_custom_call.1} parent=31 // pred_check_branch
          %209 = sbr.rel (%p207) target = $region44
        $region43: #{tpu_custom_call.1} parent=31 // pred_region
          %211 = dma.done [#allocation5], 16
        $region44: #{tpu_custom_call.1} parent=31 // pred_fallthru
          _
        %212 = sfence
        %s213 = sand.u32 %s41, 1
        %s214 = scalar_lea.sflag [#allocation3], %s213
        %s215 = sand.u32 %s41, 1
        %s216 = smul.addr %s215, 8
        %s217 = scalar_lea.vmem [#allocation2], %s216
        %p218 = pneg %p54
        %p219 = pneg %p51
        %p220 = pneg %p75
        %p221 = pneg %p72
        %p222 = pneg %p96
        %p223 = pneg %p93
        %p224 = pneg %p124
        %p225 = pneg %p121
        %s226 = smul.u32 2, %s24
        %p227 = scmp.lt.s32.totalorder %s23, 1
        %s228 = scalar_select %p227, %s23, 1
        %p229 = scmp.lt.s32.totalorder %s226, 1
        %s230 = scalar_select %p229, %s226, 1
        %s231 = smul.addr %s228, 2
        %s232 = sadd.s32 %s230, %s231
        %s233 = smul.addr %s232, 4
        %s234 = scalar_lea.vmem %s3, %s233
        %s235 = smul.u32 2, %s24
        %s236 = smul.u32 2, %s24
        %p237 = scmp.lt.s32.totalorder %s23, 1
        %s238 = scalar_select %p237, %s23, 1
        %p239 = scmp.lt.s32.totalorder %s236, 1
        %s240 = scalar_select %p239, %s236, 1
        %s241 = smul.addr %s238, 2
        %s242 = sadd.s32 %s240, %s241
        %s243 = smul.addr %s242, 4
        %s244 = scalar_lea.vmem %s3, %s243
        %s245 = smul.u32 2, %s24
        %v246 = vld [vmem:[%s196] sm:$0xff]
        %s247 = sld [smem:[#allocation6]]
        %v248 = vstv %s247
        %v249 = vmul.f32 %v246, %v248
        %s250 = sld [smem:[#allocation6 + $0x1]]
        %v251 = vstv %s250
        %v252 = vmul.f32 %v246, %v251
        %v254 = vrot.slane %v252, 5
        %v255 = vrot.slane %v254, 4
        %v257 = vadd.f32 %v249, %v255
        %s258 = sld [smem:[#allocation6 + $0x2]]
        %v259 = vstv %s258
        %v260 = vmul.f32 %v246, %v259
        %v262 = vrot.slane %v260, 6
        %v263 = vrot.slane %v262, 4
        %v265 = vadd.f32 %v257, %v263
        %s266 = sld [smem:[#allocation6 + $0x3]]
        %v267 = vstv %s266
        %v268 = vmul.f32 %v246, %v267
        %v270 = vrot.slane %v268, 7
        %v271 = vrot.slane %v270, 4
        %v273 = vadd.f32 %v265, %v271
        %s274 = sld [smem:[#allocation7]]
        %v275 = vstv %s274
        %v276 = vadd.f32 %v273, %v275
        %v278 = vrot.slane %v276, 3
        %vm279 = vcmask 1040384
        %v280 = vsel %vm279, %v276, %v278
        %v282 = vlaneseq
        %vm283 = vcmp.ge.s32.totalorder %v282, 0
        %vm284 = vcmp.lt.s32.totalorder %v282, 256
        %vm285 = vmand %vm283, %vm284
        %286 = vst.msk [vmem:[%s244] ss:$4 sm:$0x3] %vm285, %v280
        %s287 = sld [smem:[#allocation6 + $0x80]]
        %v288 = vstv %s287
        %v289 = vmul.f32 %v246, %v288
        %s290 = sld [smem:[#allocation6 + $0x81]]
        %v291 = vstv %s290
        %v292 = vmul.f32 %v246, %v291
        %v294 = vrot.slane %v292, 5
        %v295 = vrot.slane %v294, 4
        %v297 = vadd.f32 %v289, %v295
        %s298 = sld [smem:[#allocation6 + $0x82]]
        %v299 = vstv %s298
        %v300 = vmul.f32 %v246, %v299
        %v302 = vrot.slane %v300, 6
        %v303 = vrot.slane %v302, 4
        %v305 = vadd.f32 %v297, %v303
        %s306 = sld [smem:[#allocation6 + $0x83]]
        %v307 = vstv %s306
        %v308 = vmul.f32 %v246, %v307
        %v310 = vrot.slane %v308, 7
        %v311 = vrot.slane %v310, 4
        %v313 = vadd.f32 %v305, %v311
        %s314 = sld [smem:[#allocation7 + $0x1]]
        %v315 = vstv %s314
        %v316 = vadd.f32 %v313, %v315
        %v318 = vrot.slane %v316, 3
        %v319 = vsel %vm279, %v316, %v318
        %s321 = scalar_lea.vmem %s244, 1
        %322 = vst.msk [vmem:[%s321] ss:$4 sm:$0x3] %vm285, %v319
        %s323 = sld [smem:[#allocation6 + $0x100]]
        %v324 = vstv %s323
        %v325 = vmul.f32 %v246, %v324
        %s326 = sld [smem:[#allocation6 + $0x101]]
        %v327 = vstv %s326
        %v328 = vmul.f32 %v246, %v327
        %v330 = vrot.slane %v328, 5
        %v331 = vrot.slane %v330, 4
        %v333 = vadd.f32 %v325, %v331
        %s334 = sld [smem:[#allocation6 + $0x102]]
        %v335 = vstv %s334
        %v336 = vmul.f32 %v246, %v335
        %v338 = vrot.slane %v336, 6
        %v339 = vrot.slane %v338, 4
        %v341 = vadd.f32 %v333, %v339
        %s342 = sld [smem:[#allocation6 + $0x103]]
        %v343 = vstv %s342
        %v344 = vmul.f32 %v246, %v343
        %v346 = vrot.slane %v344, 7
        %v347 = vrot.slane %v346, 4
        %v349 = vadd.f32 %v341, %v347
        %s350 = sld [smem:[#allocation7 + $0x2]]
        %v351 = vstv %s350
        %v352 = vadd.f32 %v349, %v351
        %v354 = vrot.slane %v352, 3
        %v355 = vsel %vm279, %v352, %v354
        %s357 = scalar_lea.vmem %s244, 2
        %358 = vst.msk [vmem:[%s357] ss:$4 sm:$0x3] %vm285, %v355
        %s359 = smul.u32 2, %s24
        %p360 = scmp.lt.s32.totalorder %s23, 1
        %s361 = scalar_select %p360, %s23, 1
        %p362 = scmp.lt.s32.totalorder %s359, 1
        %s363 = scalar_select %p362, %s359, 1
        %s364 = smul.addr %s361, 2
        %s365 = sadd.s32 %s363, %s364
        %s366 = smul.addr %s365, 4
        %s367 = scalar_lea.vmem %s3, %s366
        // Predicated region
        $region45: #{tpu_custom_call.1} parent=31 // pred_check
          %p368 = pneg %p121
        $region46: #{tpu_custom_call.1} parent=31 // pred_check_branch
          %370 = sbr.rel (%p368) target = $region48
        $region47: #{tpu_custom_call.1} parent=31 // pred_region
          %s371 = smul.u32 2, %s24
        $region48: #{tpu_custom_call.1} parent=31 // pred_fallthru
          _
      $region32: #{tpu_custom_call.1} parent=5 // pred_fallthru
        _
      %p372 = scmp.le.s32.totalorder 2, %s14
      // Predicated region
      $region49: #{tpu_custom_call.1} parent=5 // pred_check
        %p373 = pneg %p372
      $region50: #{tpu_custom_call.1} parent=5 // pred_check_branch
        %375 = sbr.rel (%p373) target = $region52
      $region51: #{tpu_custom_call.1} parent=5 // pred_region
        %s376 = ssub.s32 %s14, 2
        // Predicated region
        $region53: #{tpu_custom_call.1} parent=51 // pred_check
          %p377 = pneg %p127
        $region54: #{tpu_custom_call.1} parent=51 // pred_check_branch
          %379 = sbr.rel (%p377) target = $region56
        $region55: #{tpu_custom_call.1} parent=51 // pred_region
          %s380 = smul.u32 2, %s26
          %p381 = scmp.lt.s32.totalorder %s25, 1
          %s382 = scalar_select %p381, %s25, 1
          %p383 = scmp.lt.s32.totalorder %s380, 1
          %s384 = scalar_select %p383, %s380, 1
          %s385 = smul.addr %s382, 2
          %s386 = sadd.s32 %s384, %s385
          %s387 = smul.addr %s386, 4
          %s388 = scalar_lea.vmem %s3, %s387
        $region56: #{tpu_custom_call.1} parent=51 // pred_fallthru
          _
      $region52: #{tpu_custom_call.1} parent=5 // pred_fallthru
        _
    $region6: #{tpu_custom_call.1} parent=1 // loop_footer
      %s18 = sadd.s32 1, %s14
    $region7: #{tpu_custom_call.1} parent=1 // loop_footer_branch
      %13 = sbr.rel target = $region3
    $region8: #{tpu_custom_call.1} parent=1 // loop_exit
      _
    %389 = vsyncpa [#allocation3], 1
    %s390 = scalar_lea.sflag [#allocation3], 1
    %391 = vsyncpa %s390, 1
    %392 = vsyncpa [#allocation4], 1
    %s393 = scalar_lea.sflag [#allocation4], 1
    %394 = vsyncpa %s393, 1
    %395 = vsyncpa [#allocation5], 1
    %s396 = scalar_lea.sflag [#allocation5], 1
    %397 = vsyncpa %s396, 1

</llo_original>
